<compile_context>
chip_gen: v6e
topology: v6e:2x2x1
jax: 0.10.0
libtpu: 0.0.40
codegen_flags: <defaults>
</compile_context>

<pallas_src>
import functools
import math

import jax
import jax.numpy as jnp
from jax import lax
from jax.experimental import pallas as pl
from jax.experimental.pallas import tpu as pltpu

TIME_EMB = 32
LABEL_EMB = 32
HIDDEN = 128
NUM_CLASSES = 10
SUBLANE = 8          # batch rows padded to a multiple of this


# -----------------------------------------------------------------------------
# Variance scheduler (buffers computed once in plain JAX; pure setup glue)
# -----------------------------------------------------------------------------
def make_var_scheduler(beta_start=0.0001, beta_end=0.02, num_steps=1000,
                       interpolation="linear"):
    if interpolation == "linear":
        betas = jnp.linspace(beta_start, beta_end, num_steps, dtype=jnp.float32)
    elif interpolation == "quadratic":
        betas = jnp.linspace(beta_start ** 0.5, beta_end ** 0.5, num_steps,
                             dtype=jnp.float32) ** 2
    else:
        raise NotImplementedError(f"Unknown interpolation {interpolation}")
    alphas = 1.0 - betas
    alpha_cumprod = jnp.cumprod(alphas)
    return {
        "betas": betas,
        "alphas": alphas,
        "alpha_cumprod": alpha_cumprod,
        "sqrt_alphas_cumprod": jnp.sqrt(alpha_cumprod),
        "sqrt_one_minus_alphas_cumprod": jnp.sqrt(1.0 - alpha_cumprod),
        "num_steps": num_steps,
    }


# -----------------------------------------------------------------------------
# Fused Pallas kernel: add_noise -> MLP -> L1, tiled over output features.
#
# grid = (D // TILE,), grid axis j indexes the output-feature tile.
#   step j == 0 : build noisy = sa*x + sb*noise, h1 = relu(noisy@W1_img + bias)
#                 (x / noise / W1_img are resident blocks, fetched once)
#   every step  : est_j = h1 @ W2[:, j-tile] + b2[j-tile]
#                 acc  += sum |est_j - noise[:, j-tile]|  (padded rows masked)
#                 loss  = acc / (B*D)   (output block revisited; final value wins)
# -----------------------------------------------------------------------------
def _fused_ddim_kernel(x_ref, noise_full_ref, sa_ref, sb_ref, w1_ref, embb_ref,
                       noise_tile_ref, w2_ref, b2_ref,
                       loss_ref, h1_scr, acc_scr, *, batch, inv_n):
    j = pl.program_id(0)

    @pl.when(j == 0)
    def _init():
        # add_noise (elementwise, f32) -> first matmul (bf16 in, f32 accum)
        noisy = sa_ref[...] * x_ref[...] + sb_ref[...] * noise_full_ref[...]
        h1 = jnp.dot(noisy.astype(jnp.bfloat16), w1_ref[...],
                     preferred_element_type=jnp.float32)
        h1_scr[...] = jnp.maximum(h1 + embb_ref[...], 0.0)
        acc_scr[...] = jnp.zeros_like(acc_scr)

    # second matmul on this output-feature tile (W2/b2/noise tiles pipelined)
    est = jnp.dot(h1_scr[...].astype(jnp.bfloat16), w2_ref[...],
                  preferred_element_type=jnp.float32) + b2_ref[...]
    diff = jnp.abs(est - noise_tile_ref[...])
    # mask sublane-padded batch rows out of the reduction
    row_ids = lax.broadcasted_iota(jnp.int32, diff.shape, 0)
    diff = jnp.where(row_ids < batch, diff, 0.0)
    acc_scr[...] += jnp.sum(diff, keepdims=True)

    # revisited (1,1) output block: written every step, last write is the loss.
    # TODO(synk): an SMEM scalar output would avoid the masked (1,1) vst, but
    # it is a single store per call and the VMEM path is the proven one.
    loss_ref[...] = acc_scr[...] * inv_n


def ddim_fused_loss(x_flat, noise, sa, sb, w1_img, emb_bias, w2, b2, *, batch):
    """x_flat/noise: (Bpad, D) f32; sa/sb/emb_bias: per-row; w1_img/w2: bf16."""
    bpad, d = x_flat.shape
    hidden = w1_img.shape[1]

    # output-feature tile: multiple of 128 lanes (falls back to full D)
    if d % 256 == 0:
        tile = 256
    elif d % 128 == 0:
        tile = 128
    else:
        tile = d
    n_tiles = d // tile
    inv_n = 1.0 / float(batch * d)

    kernel = functools.partial(_fused_ddim_kernel, batch=batch, inv_n=inv_n)

    def resident(shape):
        return pl.BlockSpec(shape, lambda j: (0,) * len(shape))

    out = pl.pallas_call(
        kernel,
        out_shape=jax.ShapeDtypeStruct((1, 1), jnp.float32),
        grid=(n_tiles,),
        in_specs=[
            resident((bpad, d)),                               # x        (resident)
            resident((bpad, d)),                               # noise    (resident, add_noise)
            resident((bpad, 1)),                               # sqrt(acp)[t]
            resident((bpad, 1)),                               # sqrt(1-acp)[t]
            resident((d, hidden)),                             # W1_img bf16 (resident)
            resident((bpad, hidden)),                          # per-row emb bias
            pl.BlockSpec((bpad, tile), lambda j: (0, j)),      # noise tile   (pipelined)
            pl.BlockSpec((hidden, tile), lambda j: (0, j)),    # W2 tile bf16 (pipelined)
            pl.BlockSpec((1, tile), lambda j: (0, j)),         # b2 tile
        ],
        out_specs=pl.BlockSpec((1, 1), lambda j: (0, 0)),
        scratch_shapes=[
            pltpu.VMEM((bpad, hidden), jnp.float32),           # h1 (resident across grid)
            pltpu.VMEM((1, 1), jnp.float32),                   # L1 sum accumulator
        ],
        compiler_params=pltpu.CompilerParams(
            # loss accumulator is carried across the grid -> not parallel
            dimension_semantics=("arbitrary",),
            # explicit budget; safe on v7x (64 MiB VMEM) as well as v5e/v6e
            vmem_limit_bytes=32 * 1024 * 1024,
        ),
    )(x_flat, noise, sa, sb, w1_img, emb_bias, noise, w2, b2)
    return out[0, 0]


# -----------------------------------------------------------------------------
# Network params (small conditional-MLP noise predictor) + DDIM forward
# -----------------------------------------------------------------------------
def init_network_params(key, img_dim):
    k1, k2, k3 = jax.random.split(key, 3)
    din = img_dim + TIME_EMB + LABEL_EMB
    w1 = jax.random.normal(k1, (din, HIDDEN), jnp.float32) / math.sqrt(din)
    w2 = jax.random.normal(k2, (HIDDEN, img_dim), jnp.float32) / math.sqrt(HIDDEN)
    label_table = jax.random.normal(k3, (NUM_CLASSES, LABEL_EMB), jnp.float32) * 0.02
    return {
        # split W1 so the image part is a lane-aligned (D, H) matmul operand
        "w1_img": w1[:img_dim].astype(jnp.bfloat16),
        "w1_temb": w1[img_dim:img_dim + TIME_EMB],          # f32, folded into bias
        "w1_lemb": w1[img_dim + TIME_EMB:],                  # f32, folded into bias
        "b1": jnp.zeros((HIDDEN,), jnp.float32),
        "w2": w2.astype(jnp.bfloat16),
        "b2": jnp.zeros((1, img_dim), jnp.float32),
        "label_table": label_table,
    }


def time_embedding(t, dim=TIME_EMB):
    half = dim // 2
    freqs = jnp.exp(-math.log(10000.0) * jnp.arange(half, dtype=jnp.float32) / half)
    args = t.astype(jnp.float32)[:, None] * freqs[None, :]
    return jnp.concatenate([jnp.sin(args), jnp.cos(args)], axis=-1)


def ddim_forward(params, scheduler, x, label, key):
    """DDIM training forward: scalar L1 loss between estimated and true noise."""
    B, C, H, W = x.shape
    D = C * H * W
    k_t, k_noise = jax.random.split(key)

    # t = randint(0, num_steps, [B]); scheduler gather (tiny plain-JAX glue)
    t = jax.random.randint(k_t, (B,), 0, scheduler["num_steps"])
    sa = scheduler["sqrt_alphas_cumprod"][t].reshape(B, 1)
    sb = scheduler["sqrt_one_minus_alphas_cumprod"][t].reshape(B, 1)

    x_flat = x.reshape(B, D).astype(jnp.float32)
    noise = jax.random.normal(k_noise, (B, D), jnp.float32)

    # tiny (B, 32) embeddings folded into a per-row hidden bias (replaces the
    # concat + misaligned K=D+64 contraction from the original formulation)
    t_emb = time_embedding(t)
    l_emb = params["label_table"][label]
    emb_bias = (t_emb @ params["w1_temb"] + l_emb @ params["w1_lemb"]
                + params["b1"][None, :]).astype(jnp.float32)

    # pad batch rows up to a sublane multiple; padded rows masked in-kernel
    bpad = ((B + SUBLANE - 1) // SUBLANE) * SUBLANE
    pad = bpad - B

    def padb(a):
        return jnp.pad(a, ((0, pad), (0, 0))) if pad else a

    return ddim_fused_loss(
        padb(x_flat), padb(noise), padb(sa), padb(sb),
        params["w1_img"], padb(emb_bias), params["w2"], params["b2"],
        batch=B)


# TODO(synk): `recover_sample` / `generate_sample` bodies are elided (`...`) in
# the reference module, so only the training forward pass is implemented.


if __name__ == "__main__":
    key = jax.random.PRNGKey(0)
    k_param, k_x, k_label, k_fwd = jax.random.split(key, 4)

    B, C, Hs, Ws = 2, 4, 16, 16                                  # NCHW like PyTorch
    x = jax.random.normal(k_x, (B, C, Hs, Ws), jnp.float32)
    label = jax.random.randint(k_label, (B,), 0, NUM_CLASSES)

    scheduler = make_var_scheduler()
    params = init_network_params(k_param, C * Hs * Ws)

    loss = ddim_forward(params, scheduler, x, label, k_fwd)
    loss = jax.block_until_ready(loss)
    assert loss.shape == () and jnp.isfinite(loss)
    print("KERNEL_OK")
</pallas_src>

<mosaic_0001>
module attributes {stable_mosaic.version = 11 : i64} {
  func.func @_fused_ddim_kernel(%arg0: i32, %arg1: memref<8x1024xf32, #tpu.memory_space<vmem>>, %arg2: memref<8x1024xf32, #tpu.memory_space<vmem>>, %arg3: memref<8x1xf32, #tpu.memory_space<vmem>>, %arg4: memref<8x1xf32, #tpu.memory_space<vmem>>, %arg5: memref<1024x128xbf16, #tpu.memory_space<vmem>>, %arg6: memref<8x128xf32, #tpu.memory_space<vmem>>, %arg7: memref<8x256xf32, #tpu.memory_space<vmem>>, %arg8: memref<128x256xbf16, #tpu.memory_space<vmem>>, %arg9: memref<1x256xf32, #tpu.memory_space<vmem>>, %arg10: memref<1x1xf32, #tpu.memory_space<vmem>>, %arg11: memref<8x128xf32, #tpu.memory_space<vmem>>, %arg12: memref<1x1xf32, #tpu.memory_space<vmem>>) attributes {dimension_semantics = [#tpu.dimension_semantics<arbitrary>], iteration_bounds = array<i64: 4>, scalar_prefetch = 0 : i64, scratch_operands = 2 : i64, tpu.core_type = #tpu.core_type<tc>, window_params = [{pipeline_mode = #tpu.pipeline_mode<synchronous>, transform_indices = @transform_0, window_bounds = array<i64: 8, 1024>}, {pipeline_mode = #tpu.pipeline_mode<synchronous>, transform_indices = @transform_1, window_bounds = array<i64: 8, 1024>}, {pipeline_mode = #tpu.pipeline_mode<synchronous>, transform_indices = @transform_2, window_bounds = array<i64: 8, 1>}, {pipeline_mode = #tpu.pipeline_mode<synchronous>, transform_indices = @transform_3, window_bounds = array<i64: 8, 1>}, {pipeline_mode = #tpu.pipeline_mode<synchronous>, transform_indices = @transform_4, window_bounds = array<i64: 1024, 128>}, {pipeline_mode = #tpu.pipeline_mode<synchronous>, transform_indices = @transform_5, window_bounds = array<i64: 8, 128>}, {transform_indices = @transform_6, window_bounds = array<i64: 8, 256>}, {transform_indices = @transform_7, window_bounds = array<i64: 128, 256>}, {transform_indices = @transform_8, window_bounds = array<i64: 1, 256>}, {pipeline_mode = #tpu.pipeline_mode<synchronous>, transform_indices = @transform_9, window_bounds = array<i64: 1, 1>}]} {
    %c0_i32 = arith.constant 0 : i32
    %0 = arith.cmpi eq, %arg0, %c0_i32 : i32
    %1 = arith.extui %0 : i1 to i32
    %c0_i32_0 = arith.constant 0 : i32
    %2 = arith.cmpi ne, %1, %c0_i32_0 : i32
    scf.if %2 {
      %c0_19 = arith.constant 0 : index
      %c0_20 = arith.constant 0 : index
      %30 = vector.load %arg3[%c0_19, %c0_20] : memref<8x1xf32, #tpu.memory_space<vmem>>, vector<8x1xf32>
      %c0_21 = arith.constant 0 : index
      %c0_22 = arith.constant 0 : index
      %31 = vector.load %arg1[%c0_21, %c0_22] : memref<8x1024xf32, #tpu.memory_space<vmem>>, vector<8x1024xf32>
      %32 = vector.broadcast %30 : vector<8x1xf32> to vector<8x1024xf32>
      %33 = arith.mulf %32, %31 : vector<8x1024xf32>
      %c0_23 = arith.constant 0 : index
      %c0_24 = arith.constant 0 : index
      %34 = vector.load %arg4[%c0_23, %c0_24] : memref<8x1xf32, #tpu.memory_space<vmem>>, vector<8x1xf32>
      %c0_25 = arith.constant 0 : index
      %c0_26 = arith.constant 0 : index
      %35 = vector.load %arg2[%c0_25, %c0_26] : memref<8x1024xf32, #tpu.memory_space<vmem>>, vector<8x1024xf32>
      %36 = vector.broadcast %34 : vector<8x1xf32> to vector<8x1024xf32>
      %37 = arith.mulf %36, %35 : vector<8x1024xf32>
      %38 = arith.addf %33, %37 : vector<8x1024xf32>
      %39 = arith.truncf %38 : vector<8x1024xf32> to vector<8x1024xbf16>
      %c0_27 = arith.constant 0 : index
      %c0_28 = arith.constant 0 : index
      %40 = vector.load %arg5[%c0_27, %c0_28] : memref<1024x128xbf16, #tpu.memory_space<vmem>>, vector<1024x128xbf16>
      %cst_29 = arith.constant dense<0.000000e+00> : vector<8x128xf32>
      %41 = tpu.matmul %39, %40, %cst_29 {dimension_numbers = #tpu.dot_dimension_numbers<[1], [0], [0], [1], [0, 0, 1, 1], [], []>} : vector<8x1024xbf16>, vector<1024x128xbf16>, vector<8x128xf32> -> vector<8x128xf32>
      %c0_30 = arith.constant 0 : index
      %c0_31 = arith.constant 0 : index
      %42 = vector.load %arg6[%c0_30, %c0_31] : memref<8x128xf32, #tpu.memory_space<vmem>>, vector<8x128xf32>
      %43 = arith.addf %41, %42 : vector<8x128xf32>
      %cst_32 = arith.constant 0.000000e+00 : f32
      %44 = vector.broadcast %cst_32 : f32 to vector<8x128xf32>
      %45 = arith.maximumf %43, %44 : vector<8x128xf32>
      %c0_33 = arith.constant 0 : index
      %c0_34 = arith.constant 0 : index
      %46 = vector.load %arg11[%c0_33, %c0_34] : memref<8x128xf32, #tpu.memory_space<vmem>>, vector<8x128xf32>
      tpu.vector_store %arg11[%c0_33, %c0_34], %45 {strides = array<i32>} : memref<8x128xf32, #tpu.memory_space<vmem>>, vector<8x128xf32>,
      %cst_35 = arith.constant 0.000000e+00 : f32
      %47 = vector.broadcast %cst_35 : f32 to vector<1x1xf32>
      %c0_36 = arith.constant 0 : index
      %c0_37 = arith.constant 0 : index
      %48 = vector.load %arg12[%c0_36, %c0_37] : memref<1x1xf32, #tpu.memory_space<vmem>>, vector<1x1xf32>
      tpu.vector_store %arg12[%c0_36, %c0_37], %47 {strides = array<i32>} : memref<1x1xf32, #tpu.memory_space<vmem>>, vector<1x1xf32>,
    } else {
    }
    %c0 = arith.constant 0 : index
    %c0_1 = arith.constant 0 : index
    %3 = vector.load %arg11[%c0, %c0_1] : memref<8x128xf32, #tpu.memory_space<vmem>>, vector<8x128xf32>
    %4 = arith.truncf %3 : vector<8x128xf32> to vector<8x128xbf16>
    %c0_2 = arith.constant 0 : index
    %c0_3 = arith.constant 0 : index
    %5 = vector.load %arg8[%c0_2, %c0_3] : memref<128x256xbf16, #tpu.memory_space<vmem>>, vector<128x256xbf16>
    %cst = arith.constant dense<0.000000e+00> : vector<8x256xf32>
    %6 = tpu.matmul %4, %5, %cst {dimension_numbers = #tpu.dot_dimension_numbers<[1], [0], [0], [1], [0, 0, 1, 1], [], []>} : vector<8x128xbf16>, vector<128x256xbf16>, vector<8x256xf32> -> vector<8x256xf32>
    %c0_4 = arith.constant 0 : index
    %c0_5 = arith.constant 0 : index
    %7 = vector.load %arg9[%c0_4, %c0_5] : memref<1x256xf32, #tpu.memory_space<vmem>>, vector<1x256xf32>
    %8 = vector.broadcast %7 : vector<1x256xf32> to vector<8x256xf32>
    %9 = arith.addf %6, %8 : vector<8x256xf32>
    %c0_6 = arith.constant 0 : index
    %c0_7 = arith.constant 0 : index
    %10 = vector.load %arg7[%c0_6, %c0_7] : memref<8x256xf32, #tpu.memory_space<vmem>>, vector<8x256xf32>
    %11 = arith.subf %9, %10 : vector<8x256xf32>
    %12 = math.absf %11 : vector<8x256xf32>
    %13 = tpu.iota {dimensions = array<i32: 0>} : vector<8x256xi32>
    %c2_i32 = arith.constant 2 : i32
    %14 = vector.broadcast %c2_i32 : i32 to vector<8x256xi32>
    %15 = arith.cmpi slt, %13, %14 : vector<8x256xi32>
    %cst_8 = arith.constant 0.000000e+00 : f32
    %16 = vector.broadcast %cst_8 : f32 to vector<8x256xf32>
    %17 = arith.select %15, %12, %16 : vector<8x256xi1>, vector<8x256xf32>
    %c0_9 = arith.constant 0 : index
    %c0_10 = arith.constant 0 : index
    %18 = vector.load %arg12[%c0_9, %c0_10] : memref<1x1xf32, #tpu.memory_space<vmem>>, vector<1x1xf32>
    %19 = vector.shape_cast %17 : vector<8x256xf32> to vector<1x8x256xf32>
    %cst_11 = arith.constant dense<0.000000e+00> : vector<1xf32>
    %20 = vector.multi_reduction <add>, %19, %cst_11 [1, 2] : vector<1x8x256xf32> to vector<1xf32>
    %21 = vector.shape_cast %20 : vector<1xf32> to vector<1x1x1xf32>
    %22 = vector.extract %21[0, 0, 0] : f32 from vector<1x1x1xf32>
    %23 = vector.broadcast %22 : f32 to vector<1x1xf32>
    %24 = arith.addf %18, %23 : vector<1x1xf32>
    %c0_12 = arith.constant 0 : index
    %c0_13 = arith.constant 0 : index
    %25 = vector.load %arg12[%c0_12, %c0_13] : memref<1x1xf32, #tpu.memory_space<vmem>>, vector<1x1xf32>
    tpu.vector_store %arg12[%c0_12, %c0_13], %24 {strides = array<i32>} : memref<1x1xf32, #tpu.memory_space<vmem>>, vector<1x1xf32>,
    %c0_14 = arith.constant 0 : index
    %c0_15 = arith.constant 0 : index
    %26 = vector.load %arg12[%c0_14, %c0_15] : memref<1x1xf32, #tpu.memory_space<vmem>>, vector<1x1xf32>
    %cst_16 = arith.constant 4.8828125E-4 : f32
    %27 = vector.broadcast %cst_16 : f32 to vector<1x1xf32>
    %28 = arith.mulf %26, %27 : vector<1x1xf32>
    %c0_17 = arith.constant 0 : index
    %c0_18 = arith.constant 0 : index
    %29 = vector.load %arg10[%c0_17, %c0_18] : memref<1x1xf32, #tpu.memory_space<vmem>>, vector<1x1xf32>
    tpu.vector_store %arg10[%c0_17, %c0_18], %28 {strides = array<i32>} : memref<1x1xf32, #tpu.memory_space<vmem>>, vector<1x1xf32>,
    return
  }
  func.func @transform_0(%arg0: i32) -> (i32, i32) {
    %c0_i32 = arith.constant 0 : i32
    %c0_i32_0 = arith.constant 0 : i32
    %c0_i32_1 = arith.constant 0 : i32
    return %c0_i32, %c0_i32_0 : i32, i32
  }
  func.func @transform_1(%arg0: i32) -> (i32, i32) {
    %c0_i32 = arith.constant 0 : i32
    %c0_i32_0 = arith.constant 0 : i32
    %c0_i32_1 = arith.constant 0 : i32
    return %c0_i32, %c0_i32_0 : i32, i32
  }
  func.func @transform_2(%arg0: i32) -> (i32, i32) {
    %c0_i32 = arith.constant 0 : i32
    %c0_i32_0 = arith.constant 0 : i32
    %c0_i32_1 = arith.constant 0 : i32
    return %c0_i32, %c0_i32_0 : i32, i32
  }
  func.func @transform_3(%arg0: i32) -> (i32, i32) {
    %c0_i32 = arith.constant 0 : i32
    %c0_i32_0 = arith.constant 0 : i32
    %c0_i32_1 = arith.constant 0 : i32
    return %c0_i32, %c0_i32_0 : i32, i32
  }
  func.func @transform_4(%arg0: i32) -> (i32, i32) {
    %c0_i32 = arith.constant 0 : i32
    %c0_i32_0 = arith.constant 0 : i32
    %c0_i32_1 = arith.constant 0 : i32
    return %c0_i32, %c0_i32_0 : i32, i32
  }
  func.func @transform_5(%arg0: i32) -> (i32, i32) {
    %c0_i32 = arith.constant 0 : i32
    %c0_i32_0 = arith.constant 0 : i32
    %c0_i32_1 = arith.constant 0 : i32
    return %c0_i32, %c0_i32_0 : i32, i32
  }
  func.func @transform_6(%arg0: i32) -> (i32, i32) {
    %c0_i32 = arith.constant 0 : i32
    %c0_i32_0 = arith.constant 0 : i32
    return %c0_i32, %arg0 : i32, i32
  }
  func.func @transform_7(%arg0: i32) -> (i32, i32) {
    %c0_i32 = arith.constant 0 : i32
    %c0_i32_0 = arith.constant 0 : i32
    return %c0_i32, %arg0 : i32, i32
  }
  func.func @transform_8(%arg0: i32) -> (i32, i32) {
    %c0_i32 = arith.constant 0 : i32
    %c0_i32_0 = arith.constant 0 : i32
    return %c0_i32, %arg0 : i32, i32
  }
  func.func @transform_9(%arg0: i32) -> (i32, i32) {
    %c0_i32 = arith.constant 0 : i32
    %c0_i32_0 = arith.constant 0 : i32
    %c0_i32_1 = arith.constant 0 : i32
    return %c0_i32, %c0_i32_0 : i32, i32
  }
}

</mosaic_0001>

<llo_original>
// kernel: tpu_custom_call.1
$region0: #{tpu_custom_call.1}
  #allocation0 [shape = 'u32[]', space=smem, size = 0x4, offset = 0x4, fixed_abs, tag = 'smem constant byte address 0x4 - core index']
  #allocation1 [shape = 'u32[144,128]{1,0:T(1,128)}', space=vmem, size = 0x12000, scoped, tag = 'internal scratch']
  #allocation2 [shape = 'f32[8,128]{1,0:T(8,128)}', space=vmem, size = 0x1000, scoped, tag = 'scratch operand']
  #allocation3 [shape = 'f32[1,1]{1,0:T(1,128)}', space=vmem, size = 0x200, scoped, tag = 'scratch operand']
  %s0 = inlined_call_operand.hbm [shape: f32[8,1024], index: 0, kind: input, shape index: {}]
  %s1 = inlined_call_operand.hbm [shape: f32[8,1024], index: 1, kind: input, shape index: {}]
  %s2 = inlined_call_operand.vmem [shape: f32[8,1], index: 2, kind: input, shape index: {}]
  %s3 = inlined_call_operand.vmem [shape: f32[8,1], index: 3, kind: input, shape index: {}]
  %s4 = inlined_call_operand.hbm [shape: bf16[1024,128], index: 4, kind: input, shape index: {}]
  %s5 = inlined_call_operand.vmem [shape: f32[8,128], index: 5, kind: input, shape index: {}]
  %s6 = inlined_call_operand.hbm [shape: f32[8,1024], index: 6, kind: input, shape index: {}]
  %s7 = inlined_call_operand.hbm [shape: bf16[128,1024], index: 7, kind: input, shape index: {}]
  %s8 = inlined_call_operand.vmem [shape: f32[1,1024], index: 8, kind: input, shape index: {}]
  %s9 = inlined_call_operand.hbm [shape: f32[1,1], index: 9, kind: output, shape index: {}]
  %s10 = sld [smem:[#allocation0]]
  $region93: #{tpu_custom_call.1} parent=0
    _
  %s12 = ssub.s32 1, %s10
  %s13 = scalar_select 0, %s12, %s10
  $region1: #{tpu_custom_call.1} parent=0
    #allocation4 [shape = 'u8[32768]{0}', space=vmem, size = 0x8000, scoped, tag = 'input window, operand 0, single buffered']
    #allocation5 [shape = 's32[2]{0}', space=sflag, size = 0x8, scoped, tag = 'scoped memory for tpu_custom_call.1']
    #allocation6 [shape = 's32[2]{0}', space=sflag, size = 0x8, scoped, tag = 'scoped memory for tpu_custom_call.1']
    #allocation7 [shape = 'u8[32768]{0}', space=vmem, size = 0x8000, scoped, tag = 'input window, operand 1, single buffered']
    #allocation8 [shape = 's32[1]{0}', space=sflag, size = 0x4, scoped, tag = 'scoped memory for tpu_custom_call.1']
    #allocation9 [shape = 'u8[262144]{0}', space=vmem, size = 0x40000, scoped, tag = 'input window, operand 4, single buffered']
    #allocation10 [shape = 'u8[16384]{0}', space=vmem, size = 0x4000, scoped, tag = 'input window, operand 6']
    #allocation11 [shape = 's32[2]{0}', space=sflag, size = 0x8, scoped, tag = 'scoped memory for tpu_custom_call.1']
    #allocation12 [shape = 'u8[131072]{0}', space=vmem, size = 0x20000, scoped, tag = 'input window, operand 7']
    #allocation13 [shape = 'u8[512]{0}', space=vmem, size = 0x400, scoped, tag = 'output window, operand 0, single buffered']
    %14 = vsyncpa [#allocation5], 0
    %15 = vsyncpa [#allocation8], 0
    %16 = vsyncpa [#allocation11], 0
    %s17 = scalar_lea.sflag [#allocation11], 1
    %18 = vsyncpa %s17, 0
    %19 = vsyncpa [#allocation6], 0
    loop: start=0, step=1, limit=6
    $region2: #{tpu_custom_call.1} parent=1 // loop_pre_header
      _
    $region3: #{tpu_custom_call.1} parent=1 // loop_header
      %s21 = sphi 0, %s25
      %p22 = scmp.ge.s32.totalorder %s21, 6
      %s29 = sphi 0, %s29
      %s31 = sphi 0, %s29
      %s32 = sphi 0, %s31
      %s46 = sphi 0, %s32
      %s50 = sphi 0, %s50
      %s52 = sphi 0, %s50
      %s53 = sphi 0, %s52
      %s67 = sphi 0, %s53
      %s71 = sphi 0, %s71
      %s73 = sphi 0, %s71
      %s74 = sphi 0, %s73
      %s88 = sphi 0, %s74
      %s92 = sphi 0, %s92
      %s94 = sphi 0, %s92
      %s95 = sphi 0, %s94
      %s109 = sphi 0, %s95
      %s113 = sphi 0, %s113
      %s115 = sphi 0, %s113
      %s116 = sphi 0, %s115
      %s130 = sphi 0, %s116
      %s134 = sphi 0, %s134
      %s136 = sphi 0, %s134
      %s137 = sphi 0, %s136
      %s151 = sphi 0, %s137
      %s157 = sphi 0, %s159
      %s160 = sphi 0, %s157
      %s161 = sphi 0, %s160
      %s177 = sphi 0, %s161
      %s183 = sphi 0, %s185
      %s186 = sphi 0, %s183
      %s187 = sphi 0, %s186
      %s203 = sphi 0, %s187
      %s209 = sphi 0, %s211
      %s212 = sphi 0, %s209
      %s213 = sphi 0, %s212
      %s229 = sphi 0, %s213
      %s233 = sphi 0, %s233
      %s235 = sphi 0, %s233
      %s236 = sphi 0, %s235
      %s250 = sphi 0, %s236
    $region4: #{tpu_custom_call.1} parent=1 // loop_header_branch
      %24 = sbr.rel (%p22) target = $region8
    $region5: #{tpu_custom_call.1} parent=1 // loop_body
      %s26 = ssub.s32 %s21, 1
      %s27 = ssub.s32 %s21, 2
      %s28 = sadd.s32 %s21, 1
      %s30 = sadd.s32 %s29, 1
      %p33 = scmp.eq.s32.totalorder %s21, 3
      %p34 = scmp.ne.s32.totalorder %s29, %s31
      %p35 = scmp.eq.s32.totalorder %s21, 0
      %p36 = por %p34, %p35
      %p37 = scmp.ne.s32.totalorder %s29, %s31
      %p38 = scmp.eq.s32.totalorder %s26, 3
      %p39 = por %p37, %p38
      %p40 = scmp.ne.s32.totalorder %s31, %s32
      %p41 = scmp.eq.s32.totalorder %s26, 0
      %p42 = por %p40, %p41
      %p43 = scmp.ne.s32.totalorder %s31, %s32
      %p44 = scmp.eq.s32.totalorder %s27, 3
      %p45 = por %p43, %p44
      %p47 = scmp.ne.s32.totalorder %s32, %s46
      %p48 = scmp.eq.s32.totalorder %s27, 0
      %p49 = por %p47, %p48
      %s51 = sadd.s32 %s50, 1
      %p54 = scmp.eq.s32.totalorder %s21, 3
      %p55 = scmp.ne.s32.totalorder %s50, %s52
      %p56 = scmp.eq.s32.totalorder %s21, 0
      %p57 = por %p55, %p56
      %p58 = scmp.ne.s32.totalorder %s50, %s52
      %p59 = scmp.eq.s32.totalorder %s26, 3
      %p60 = por %p58, %p59
      %p61 = scmp.ne.s32.totalorder %s52, %s53
      %p62 = scmp.eq.s32.totalorder %s26, 0
      %p63 = por %p61, %p62
      %p64 = scmp.ne.s32.totalorder %s52, %s53
      %p65 = scmp.eq.s32.totalorder %s27, 3
      %p66 = por %p64, %p65
      %p68 = scmp.ne.s32.totalorder %s53, %s67
      %p69 = scmp.eq.s32.totalorder %s27, 0
      %p70 = por %p68, %p69
      %s72 = sadd.s32 %s71, 1
      %p75 = scmp.eq.s32.totalorder %s21, 3
      %p76 = scmp.ne.s32.totalorder %s71, %s73
      %p77 = scmp.eq.s32.totalorder %s21, 0
      %p78 = por %p76, %p77
      %p79 = scmp.ne.s32.totalorder %s71, %s73
      %p80 = scmp.eq.s32.totalorder %s26, 3
      %p81 = por %p79, %p80
      %p82 = scmp.ne.s32.totalorder %s73, %s74
      %p83 = scmp.eq.s32.totalorder %s26, 0
      %p84 = por %p82, %p83
      %p85 = scmp.ne.s32.totalorder %s73, %s74
      %p86 = scmp.eq.s32.totalorder %s27, 3
      %p87 = por %p85, %p86
      %p89 = scmp.ne.s32.totalorder %s74, %s88
      %p90 = scmp.eq.s32.totalorder %s27, 0
      %p91 = por %p89, %p90
      %s93 = sadd.s32 %s92, 1
      %p96 = scmp.eq.s32.totalorder %s21, 3
      %p97 = scmp.ne.s32.totalorder %s92, %s94
      %p98 = scmp.eq.s32.totalorder %s21, 0
      %p99 = por %p97, %p98
      %p100 = scmp.ne.s32.totalorder %s92, %s94
      %p101 = scmp.eq.s32.totalorder %s26, 3
      %p102 = por %p100, %p101
      %p103 = scmp.ne.s32.totalorder %s94, %s95
      %p104 = scmp.eq.s32.totalorder %s26, 0
      %p105 = por %p103, %p104
      %p106 = scmp.ne.s32.totalorder %s94, %s95
      %p107 = scmp.eq.s32.totalorder %s27, 3
      %p108 = por %p106, %p107
      %p110 = scmp.ne.s32.totalorder %s95, %s109
      %p111 = scmp.eq.s32.totalorder %s27, 0
      %p112 = por %p110, %p111
      %s114 = sadd.s32 %s113, 1
      %p117 = scmp.eq.s32.totalorder %s21, 3
      %p118 = scmp.ne.s32.totalorder %s113, %s115
      %p119 = scmp.eq.s32.totalorder %s21, 0
      %p120 = por %p118, %p119
      %p121 = scmp.ne.s32.totalorder %s113, %s115
      %p122 = scmp.eq.s32.totalorder %s26, 3
      %p123 = por %p121, %p122
      %p124 = scmp.ne.s32.totalorder %s115, %s116
      %p125 = scmp.eq.s32.totalorder %s26, 0
      %p126 = por %p124, %p125
      %p127 = scmp.ne.s32.totalorder %s115, %s116
      %p128 = scmp.eq.s32.totalorder %s27, 3
      %p129 = por %p127, %p128
      %p131 = scmp.ne.s32.totalorder %s116, %s130
      %p132 = scmp.eq.s32.totalorder %s27, 0
      %p133 = por %p131, %p132
      %s135 = sadd.s32 %s134, 1
      %p138 = scmp.eq.s32.totalorder %s21, 3
      %p139 = scmp.ne.s32.totalorder %s134, %s136
      %p140 = scmp.eq.s32.totalorder %s21, 0
      %p141 = por %p139, %p140
      %p142 = scmp.ne.s32.totalorder %s134, %s136
      %p143 = scmp.eq.s32.totalorder %s26, 3
      %p144 = por %p142, %p143
      %p145 = scmp.ne.s32.totalorder %s136, %s137
      %p146 = scmp.eq.s32.totalorder %s26, 0
      %p147 = por %p145, %p146
      %p148 = scmp.ne.s32.totalorder %s136, %s137
      %p149 = scmp.eq.s32.totalorder %s27, 3
      %p150 = por %p148, %p149
      %p152 = scmp.ne.s32.totalorder %s137, %s151
      %p153 = scmp.eq.s32.totalorder %s27, 0
      %p154 = por %p152, %p153
      %s155 = ssub.s32 %s21, %s28
      %p156 = scmp.eq.s32.totalorder %s155, 0
      %s158 = sadd.s32 %s157, 1
      %s159 = scalar_select %p156, %s157, %s158
      %p162 = pneg %p156
      %p163 = scmp.eq.s32.totalorder %s21, 3
      %p164 = por %p162, %p163
      %p165 = scmp.ne.s32.totalorder %s157, %s160
      %p166 = scmp.eq.s32.totalorder %s21, 0
      %p167 = por %p165, %p166
      %p168 = scmp.ne.s32.totalorder %s157, %s160
      %p169 = scmp.eq.s32.totalorder %s26, 3
      %p170 = por %p168, %p169
      %p171 = scmp.ne.s32.totalorder %s160, %s161
      %p172 = scmp.eq.s32.totalorder %s26, 0
      %p173 = por %p171, %p172
      %p174 = scmp.ne.s32.totalorder %s160, %s161
      %p175 = scmp.eq.s32.totalorder %s27, 3
      %p176 = por %p174, %p175
      %p178 = scmp.ne.s32.totalorder %s161, %s177
      %p179 = scmp.eq.s32.totalorder %s27, 0
      %p180 = por %p178, %p179
      %s181 = ssub.s32 %s21, %s28
      %p182 = scmp.eq.s32.totalorder %s181, 0
      %s184 = sadd.s32 %s183, 1
      %s185 = scalar_select %p182, %s183, %s184
      %p188 = pneg %p182
      %p189 = scmp.eq.s32.totalorder %s21, 3
      %p190 = por %p188, %p189
      %p191 = scmp.ne.s32.totalorder %s183, %s186
      %p192 = scmp.eq.s32.totalorder %s21, 0
      %p193 = por %p191, %p192
      %p194 = scmp.ne.s32.totalorder %s183, %s186
      %p195 = scmp.eq.s32.totalorder %s26, 3
      %p196 = por %p194, %p195
      %p197 = scmp.ne.s32.totalorder %s186, %s187
      %p198 = scmp.eq.s32.totalorder %s26, 0
      %p199 = por %p197, %p198
      %p200 = scmp.ne.s32.totalorder %s186, %s187
      %p201 = scmp.eq.s32.totalorder %s27, 3
      %p202 = por %p200, %p201
      %p204 = scmp.ne.s32.totalorder %s187, %s203
      %p205 = scmp.eq.s32.totalorder %s27, 0
      %p206 = por %p204, %p205
      %s207 = ssub.s32 %s21, %s28
      %p208 = scmp.eq.s32.totalorder %s207, 0
      %s210 = sadd.s32 %s209, 1
      %s211 = scalar_select %p208, %s209, %s210
      %p214 = pneg %p208
      %p215 = scmp.eq.s32.totalorder %s21, 3
      %p216 = por %p214, %p215
      %p217 = scmp.ne.s32.totalorder %s209, %s212
      %p218 = scmp.eq.s32.totalorder %s21, 0
      %p219 = por %p217, %p218
      %p220 = scmp.ne.s32.totalorder %s209, %s212
      %p221 = scmp.eq.s32.totalorder %s26, 3
      %p222 = por %p220, %p221
      %p223 = scmp.ne.s32.totalorder %s212, %s213
      %p224 = scmp.eq.s32.totalorder %s26, 0
      %p225 = por %p223, %p224
      %p226 = scmp.ne.s32.totalorder %s212, %s213
      %p227 = scmp.eq.s32.totalorder %s27, 3
      %p228 = por %p226, %p227
      %p230 = scmp.ne.s32.totalorder %s213, %s229
      %p231 = scmp.eq.s32.totalorder %s27, 0
      %p232 = por %p230, %p231
      %s234 = sadd.s32 %s233, 1
      %p237 = scmp.eq.s32.totalorder %s21, 3
      %p238 = scmp.ne.s32.totalorder %s233, %s235
      %p239 = scmp.eq.s32.totalorder %s21, 0
      %p240 = por %p238, %p239
      %p241 = scmp.ne.s32.totalorder %s233, %s235
      %p242 = scmp.eq.s32.totalorder %s26, 3
      %p243 = por %p241, %p242
      %p244 = scmp.ne.s32.totalorder %s235, %s236
      %p245 = scmp.eq.s32.totalorder %s26, 0
      %p246 = por %p244, %p245
      %p247 = scmp.ne.s32.totalorder %s235, %s236
      %p248 = scmp.eq.s32.totalorder %s27, 3
      %p249 = por %p247, %p248
      %p251 = scmp.ne.s32.totalorder %s236, %s250
      %p252 = scmp.eq.s32.totalorder %s27, 0
      %p253 = por %p251, %p252
      %p254 = scmp.le.s32.totalorder 1, %s21
      %p255 = scmp.lt.s32.totalorder %s21, 5
      %p256 = pnand %p254, %p255
      %p257 = pneg %p256
      // Predicated region
      $region9: #{tpu_custom_call.1} parent=5 // pred_check
        _
      $region10: #{tpu_custom_call.1} parent=5 // pred_check_branch
        %259 = sbr.rel (%p256) target = $region12
      $region11: #{tpu_custom_call.1} parent=5 // pred_region
        %s260 = ssub.s32 %s21, 1
        // Predicated region
        $region13: #{tpu_custom_call.1} parent=11 // pred_check
          %p261 = pneg %p42
        $region14: #{tpu_custom_call.1} parent=11 // pred_check_branch
          %263 = sbr.rel (%p261) target = $region16
        $region15: #{tpu_custom_call.1} parent=11 // pred_region
          %s265 = ssub.s32 1024, 1024
          %266 = vsyncadd [#allocation5], %s265
          %s268 = sshll.u32 [#allocation4], 4
          %s269 = int_to_ptr.vmem [resolvable:$true] %s268
          %271 = dma.hbm_to_vmem [thread:$0]  %s0, 1024, %s269, [#allocation5]
        $region16: #{tpu_custom_call.1} parent=11 // pred_fallthru
          _
        // Predicated region
        $region17: #{tpu_custom_call.1} parent=11 // pred_check
          %p272 = pneg %p63
        $region18: #{tpu_custom_call.1} parent=11 // pred_check_branch
          %274 = sbr.rel (%p272) target = $region20
        $region19: #{tpu_custom_call.1} parent=11 // pred_region
          %s276 = ssub.s32 1024, 1024
          %277 = vsyncadd [#allocation8], %s276
          %s279 = sshll.u32 [#allocation7], 4
          %s280 = int_to_ptr.vmem [resolvable:$true] %s279
          %282 = dma.hbm_to_vmem [thread:$0]  %s1, 1024, %s280, [#allocation8]
        $region20: #{tpu_custom_call.1} parent=11 // pred_fallthru
          _
        // Predicated region
        $region21: #{tpu_custom_call.1} parent=11 // pred_check
          %p283 = pneg %p84
        $region22: #{tpu_custom_call.1} parent=11 // pred_check_branch
          %285 = sbr.rel (%p283) target = $region24
        $region23: #{tpu_custom_call.1} parent=11 // pred_region
          _
        $region24: #{tpu_custom_call.1} parent=11 // pred_fallthru
          _
        // Predicated region
        $region25: #{tpu_custom_call.1} parent=11 // pred_check
          %p286 = pneg %p105
        $region26: #{tpu_custom_call.1} parent=11 // pred_check_branch
          %288 = sbr.rel (%p286) target = $region28
        $region27: #{tpu_custom_call.1} parent=11 // pred_region
          _
        $region28: #{tpu_custom_call.1} parent=11 // pred_fallthru
          _
        // Predicated region
        $region29: #{tpu_custom_call.1} parent=11 // pred_check
          %p289 = pneg %p126
        $region30: #{tpu_custom_call.1} parent=11 // pred_check_branch
          %291 = sbr.rel (%p289) target = $region32
        $region31: #{tpu_custom_call.1} parent=11 // pred_region
          %s293 = ssub.s32 8192, 8192
          %294 = vsyncadd [#allocation8], %s293
          %s295 = sshll.u32 [#allocation9], 4
          %s296 = int_to_ptr.vmem [resolvable:$true] %s295
          %301 = dma.hbm_to_vmem [thread:$0]  %s4, 8192, %s296, [#allocation8], 64, 64, 4
        $region32: #{tpu_custom_call.1} parent=11 // pred_fallthru
          _
        // Predicated region
        $region33: #{tpu_custom_call.1} parent=11 // pred_check
          %p302 = pneg %p147
        $region34: #{tpu_custom_call.1} parent=11 // pred_check_branch
          %304 = sbr.rel (%p302) target = $region36
        $region35: #{tpu_custom_call.1} parent=11 // pred_region
          _
        $region36: #{tpu_custom_call.1} parent=11 // pred_fallthru
          _
      $region12: #{tpu_custom_call.1} parent=5 // pred_fallthru
        _
      %p305 = scmp.lt.s32.totalorder %s21, 4
      // Predicated region
      $region37: #{tpu_custom_call.1} parent=5 // pred_check
        %p306 = pneg %p305
      $region38: #{tpu_custom_call.1} parent=5 // pred_check_branch
        %308 = sbr.rel (%p306) target = $region40
      $region39: #{tpu_custom_call.1} parent=5 // pred_region
        // Predicated region
        $region41: #{tpu_custom_call.1} parent=39 // pred_check
          %p309 = pneg %p167
        $region42: #{tpu_custom_call.1} parent=39 // pred_check_branch
          %311 = sbr.rel (%p309) target = $region44
        $region43: #{tpu_custom_call.1} parent=39 // pred_region
          %s312 = sand.u32 %s21, 1
          %s313 = scalar_lea.sflag [#allocation11], %s312
          %s314 = sand.u32 %s157, 1
          %s315 = smul.addr %s314, 16
          %s316 = scalar_lea.vmem [#allocation10], %s315
          %s317 = smul.u32 2, %s21
          %s319 = ssub.s32 256, 256
          %320 = vsyncadd %s313, %s319
          %s321 = smul.addr %s317, 128
          %s322 = scalar_lea.hbm %s6, %s321
          %s324 = sshll.u32 %s316, 4
          %s325 = int_to_ptr.vmem [resolvable:$true] %s324
          %327 = dma.hbm_to_vmem [thread:$0]  %s322, 256, %s325, %s313
        $region44: #{tpu_custom_call.1} parent=39 // pred_fallthru
          _
        // Predicated region
        $region45: #{tpu_custom_call.1} parent=39 // pred_check
          %p328 = pneg %p193
        $region46: #{tpu_custom_call.1} parent=39 // pred_check_branch
          %330 = sbr.rel (%p328) target = $region48
        $region47: #{tpu_custom_call.1} parent=39 // pred_region
          %s331 = sand.u32 %s21, 1
          %s332 = scalar_lea.sflag [#allocation11], %s331
          %s333 = sand.u32 %s183, 1
          %s334 = smul.addr %s333, 128
          %s335 = scalar_lea.vmem [#allocation12], %s334
          %s336 = smul.u32 2, %s21
          %s338 = ssub.s32 2048, 2048
          %339 = vsyncadd %s332, %s338
          %s340 = smul.addr %s336, 64
          %s341 = scalar_lea.hbm %s7, %s340
          %s342 = sshll.u32 %s335, 4
          %s343 = int_to_ptr.vmem [resolvable:$true] %s342
          %348 = dma.hbm_to_vmem [thread:$0]  %s341, 2048, %s343, %s332, 512, 128, 8
        $region48: #{tpu_custom_call.1} parent=39 // pred_fallthru
          _
        // Predicated region
        $region49: #{tpu_custom_call.1} parent=39 // pred_check
          %p349 = pneg %p219
        $region50: #{tpu_custom_call.1} parent=39 // pred_check_branch
          %351 = sbr.rel (%p349) target = $region52
        $region51: #{tpu_custom_call.1} parent=39 // pred_region
          %s352 = smul.u32 2, %s21
          %p353 = scmp.lt.s32.totalorder %s352, 7
          %s354 = scalar_select %p353, %s352, 7
          %s355 = scalar_lea.vmem %s8, %s354
          %s356 = smul.u32 2, %s21
        $region52: #{tpu_custom_call.1} parent=39 // pred_fallthru
          _
      $region40: #{tpu_custom_call.1} parent=5 // pred_fallthru
        _
      %p357 = scmp.le.s32.totalorder 1, %s21
      %p358 = scmp.lt.s32.totalorder %s21, 5
      %p359 = pnand %p357, %p358
      %p360 = pneg %p359
      // Predicated region
      $region53: #{tpu_custom_call.1} parent=5 // pred_check
        _
      $region54: #{tpu_custom_call.1} parent=5 // pred_check_branch
        %362 = sbr.rel (%p359) target = $region56
      $region55: #{tpu_custom_call.1} parent=5 // pred_region
        %s363 = ssub.s32 %s21, 1
        // Predicated region
        $region57: #{tpu_custom_call.1} parent=55 // pred_check
          %p364 = pneg %p42
        $region58: #{tpu_custom_call.1} parent=55 // pred_check_branch
          %366 = sbr.rel (%p364) target = $region60
        $region59: #{tpu_custom_call.1} parent=55 // pred_region
          %367 = dma.done [#allocation5], 1024
        $region60: #{tpu_custom_call.1} parent=55 // pred_fallthru
          _
        // Predicated region
        $region61: #{tpu_custom_call.1} parent=55 // pred_check
          %p368 = pneg %p63
        $region62: #{tpu_custom_call.1} parent=55 // pred_check_branch
          %370 = sbr.rel (%p368) target = $region64
        $region63: #{tpu_custom_call.1} parent=55 // pred_region
          %371 = dma.done [#allocation8], 1024
        $region64: #{tpu_custom_call.1} parent=55 // pred_fallthru
          _
        // Predicated region
        $region65: #{tpu_custom_call.1} parent=55 // pred_check
          %p372 = pneg %p126
        $region66: #{tpu_custom_call.1} parent=55 // pred_check_branch
          %374 = sbr.rel (%p372) target = $region68
        $region67: #{tpu_custom_call.1} parent=55 // pred_region
          %375 = dma.done [#allocation8], 8192
        $region68: #{tpu_custom_call.1} parent=55 // pred_fallthru
          _
        %s376 = sand.u32 %s26, 1
        %s377 = scalar_lea.sflag [#allocation11], %s376
        %s378 = sand.u32 %s160, 1
        %s379 = smul.addr %s378, 16
        %s380 = scalar_lea.vmem [#allocation10], %s379
        // Predicated region
        $region69: #{tpu_custom_call.1} parent=55 // pred_check
          %p381 = pneg %p173
        $region70: #{tpu_custom_call.1} parent=55 // pred_check_branch
          %383 = sbr.rel (%p381) target = $region72
        $region71: #{tpu_custom_call.1} parent=55 // pred_region
          %384 = dma.done %s377, 256
        $region72: #{tpu_custom_call.1} parent=55 // pred_fallthru
          _
        %s385 = sand.u32 %s26, 1
        %s386 = scalar_lea.sflag [#allocation11], %s385
        %s387 = sand.u32 %s186, 1
        %s388 = smul.addr %s387, 128
        %s389 = scalar_lea.vmem [#allocation12], %s388
        // Predicated region
        $region73: #{tpu_custom_call.1} parent=55 // pred_check
          %p390 = pneg %p199
        $region74: #{tpu_custom_call.1} parent=55 // pred_check_branch
          %392 = sbr.rel (%p390) target = $region76
        $region75: #{tpu_custom_call.1} parent=55 // pred_region
          %393 = dma.done %s386, 2048
        $region76: #{tpu_custom_call.1} parent=55 // pred_fallthru
          _
        %p394 = pneg %p42
        %p395 = pneg %p39
        %p396 = pneg %p63
        %p397 = pneg %p60
        %p398 = pneg %p84
        %p399 = pneg %p81
        %p400 = pneg %p105
        %p401 = pneg %p102
        %p402 = pneg %p126
        %p403 = pneg %p123
        %p404 = pneg %p147
        %p405 = pneg %p144
        %s406 = sand.u32 %s26, 1
        %s407 = scalar_lea.sflag [#allocation11], %s406
        %s408 = sand.u32 %s160, 1
        %s409 = smul.addr %s408, 16
        %s410 = scalar_lea.vmem [#allocation10], %s409
        %p411 = pneg %p173
        %p412 = pneg %p170
        %s413 = sand.u32 %s26, 1
        %s414 = scalar_lea.sflag [#allocation11], %s413
        %s415 = sand.u32 %s186, 1
        %s416 = smul.addr %s415, 128
        %s417 = scalar_lea.vmem [#allocation12], %s416
        %p418 = pneg %p199
        %p419 = pneg %p196
        %s420 = smul.u32 2, %s26
        %p421 = scmp.lt.s32.totalorder %s420, 7
        %s422 = scalar_select %p421, %s420, 7
        %s423 = scalar_lea.vmem %s8, %s422
        %p424 = pneg %p225
        %p425 = pneg %p222
        %p426 = pneg %p246
        %p427 = pneg %p243
        %s428 = smul.u32 2, %s26
        %s429 = smul.u32 2, %s26
        %s430 = smul.u32 2, %s26
        %p431 = scmp.lt.s32.totalorder %s430, 7
        %s432 = scalar_select %p431, %s430, 7
        %s433 = scalar_lea.vmem %s8, %s432
        %s434 = smul.u32 2, %s26
        %p436 = scmp.eq.s32.totalorder %s26, 0
        // Predicated region
        $region77: #{tpu_custom_call.1} parent=55 // pred_check
          %p437 = pneg %p436
        $region78: #{tpu_custom_call.1} parent=55 // pred_check_branch
          %439 = sbr.rel (%p437) target = $region80
        $region79: #{tpu_custom_call.1} parent=55 // pred_region
          %v440 = vld [vmem:[%s2] sm:$0xff]
          %v441 = vld [vmem:[#allocation4] sm:$0xff]
          %v442 = vld [vmem:[#allocation4 + $0x8] sm:$0xff]
          %v443 = vld [vmem:[#allocation4 + $0x10] sm:$0xff]
          %v444 = vld [vmem:[#allocation4 + $0x18] sm:$0xff]
          %v445 = vld [vmem:[#allocation4 + $0x20] sm:$0xff]
          %v446 = vld [vmem:[#allocation4 + $0x28] sm:$0xff]
          %v447 = vld [vmem:[#allocation4 + $0x30] sm:$0xff]
          %v448 = vld [vmem:[#allocation4 + $0x38] sm:$0xff]
          %450 = vset.pattern.permute.xlu0 0
          %451 = vperm.xlu0 %450, %v440
          %v452 = vpop.permute.xlu0 %451
          %v454 = vmul.f32 %v452, %v441
          %v455 = vmul.f32 %v452, %v442
          %v456 = vmul.f32 %v452, %v443
          %v457 = vmul.f32 %v452, %v444
          %v458 = vmul.f32 %v452, %v445
          %v459 = vmul.f32 %v452, %v446
          %v460 = vmul.f32 %v452, %v447
          %v461 = vmul.f32 %v452, %v448
          %v462 = vld [vmem:[%s3] sm:$0xff]
          %v463 = vld [vmem:[#allocation7] sm:$0xff]
          %v464 = vld [vmem:[#allocation7 + $0x8] sm:$0xff]
          %v465 = vld [vmem:[#allocation7 + $0x10] sm:$0xff]
          %v466 = vld [vmem:[#allocation7 + $0x18] sm:$0xff]
          %v467 = vld [vmem:[#allocation7 + $0x20] sm:$0xff]
          %v468 = vld [vmem:[#allocation7 + $0x28] sm:$0xff]
          %v469 = vld [vmem:[#allocation7 + $0x30] sm:$0xff]
          %v470 = vld [vmem:[#allocation7 + $0x38] sm:$0xff]
          %472 = vset.pattern.permute.xlu0 0
          %473 = vperm.xlu0 %472, %v462
          %v474 = vpop.permute.xlu0 %473
          %v476 = vmul.f32 %v474, %v463
          %v477 = vmul.f32 %v474, %v464
          %v478 = vmul.f32 %v474, %v465
          %v479 = vmul.f32 %v474, %v466
          %v480 = vmul.f32 %v474, %v467
          %v481 = vmul.f32 %v474, %v468
          %v482 = vmul.f32 %v474, %v469
          %v483 = vmul.f32 %v474, %v470
          %v484 = vadd.f32 %v454, %v476
          %v485 = vadd.f32 %v455, %v477
          %v486 = vadd.f32 %v456, %v478
          %v487 = vadd.f32 %v457, %v479
          %v488 = vadd.f32 %v458, %v480
          %v489 = vadd.f32 %v459, %v481
          %v490 = vadd.f32 %v460, %v482
          %v491 = vadd.f32 %v461, %v483
          %v492 = vpack.c.bf16 %v484, %v484
          %v493 = vpack.c.bf16 %v485, %v485
          %v494 = vpack.c.bf16 %v486, %v486
          %v495 = vpack.c.bf16 %v487, %v487
          %v496 = vpack.c.bf16 %v488, %v488
          %v497 = vpack.c.bf16 %v489, %v489
          %v498 = vpack.c.bf16 %v490, %v490
          %v499 = vpack.c.bf16 %v491, %v491
          %v500 = vld [vmem:[#allocation9] sm:$0xf]
          %v501 = vld [vmem:[#allocation9 + $0x4] sm:$0xf]
          %v502 = vld [vmem:[#allocation9 + $0x8] sm:$0xf]
          %v503 = vld [vmem:[#allocation9 + $0xc] sm:$0xf]
          %v504 = vld [vmem:[#allocation9 + $0x10] sm:$0xf]
          %v505 = vld [vmem:[#allocation9 + $0x14] sm:$0xf]
          %v506 = vld [vmem:[#allocation9 + $0x18] sm:$0xf]
          %v507 = vld [vmem:[#allocation9 + $0x1c] sm:$0xf]
          %v508 = vld [vmem:[#allocation9 + $0x20] sm:$0xf]
          %v509 = vld [vmem:[#allocation9 + $0x24] sm:$0xf]
          %v510 = vld [vmem:[#allocation9 + $0x28] sm:$0xf]
          %v511 = vld [vmem:[#allocation9 + $0x2c] sm:$0xf]
          %v512 = vld [vmem:[#allocation9 + $0x30] sm:$0xf]
          %v513 = vld [vmem:[#allocation9 + $0x34] sm:$0xf]
          %v514 = vld [vmem:[#allocation9 + $0x38] sm:$0xf]
          %v515 = vld [vmem:[#allocation9 + $0x3c] sm:$0xf]
          %v516 = vld [vmem:[#allocation9 + $0x40] sm:$0xf]
          %v517 = vld [vmem:[#allocation9 + $0x44] sm:$0xf]
          %v518 = vld [vmem:[#allocation9 + $0x48] sm:$0xf]
          %v519 = vld [vmem:[#allocation9 + $0x4c] sm:$0xf]
          %v520 = vld [vmem:[#allocation9 + $0x50] sm:$0xf]
          %v521 = vld [vmem:[#allocation9 + $0x54] sm:$0xf]
          %v522 = vld [vmem:[#allocation9 + $0x58] sm:$0xf]
          %v523 = vld [vmem:[#allocation9 + $0x5c] sm:$0xf]
          %v524 = vld [vmem:[#allocation9 + $0x60] sm:$0xf]
          %v525 = vld [vmem:[#allocation9 + $0x64] sm:$0xf]
          %v526 = vld [vmem:[#allocation9 + $0x68] sm:$0xf]
          %v527 = vld [vmem:[#allocation9 + $0x6c] sm:$0xf]
          %v528 = vld [vmem:[#allocation9 + $0x70] sm:$0xf]
          %v529 = vld [vmem:[#allocation9 + $0x74] sm:$0xf]
          %v530 = vld [vmem:[#allocation9 + $0x78] sm:$0xf]
          %v531 = vld [vmem:[#allocation9 + $0x7c] sm:$0xf]
          %v532 = vld [vmem:[#allocation9 + $0x80] sm:$0xf]
          %v533 = vld [vmem:[#allocation9 + $0x84] sm:$0xf]
          %v534 = vld [vmem:[#allocation9 + $0x88] sm:$0xf]
          %v535 = vld [vmem:[#allocation9 + $0x8c] sm:$0xf]
          %v536 = vld [vmem:[#allocation9 + $0x90] sm:$0xf]
          %v537 = vld [vmem:[#allocation9 + $0x94] sm:$0xf]
          %v538 = vld [vmem:[#allocation9 + $0x98] sm:$0xf]
          %v539 = vld [vmem:[#allocation9 + $0x9c] sm:$0xf]
          %v540 = vld [vmem:[#allocation9 + $0xa0] sm:$0xf]
          %v541 = vld [vmem:[#allocation9 + $0xa4] sm:$0xf]
          %v542 = vld [vmem:[#allocation9 + $0xa8] sm:$0xf]
          %v543 = vld [vmem:[#allocation9 + $0xac] sm:$0xf]
          %v544 = vld [vmem:[#allocation9 + $0xb0] sm:$0xf]
          %v545 = vld [vmem:[#allocation9 + $0xb4] sm:$0xf]
          %v546 = vld [vmem:[#allocation9 + $0xb8] sm:$0xf]
          %v547 = vld [vmem:[#allocation9 + $0xbc] sm:$0xf]
          %v548 = vld [vmem:[#allocation9 + $0xc0] sm:$0xf]
          %v549 = vld [vmem:[#allocation9 + $0xc4] sm:$0xf]
          %v550 = vld [vmem:[#allocation9 + $0xc8] sm:$0xf]
          %v551 = vld [vmem:[#allocation9 + $0xcc] sm:$0xf]
          %v552 = vld [vmem:[#allocation9 + $0xd0] sm:$0xf]
          %v553 = vld [vmem:[#allocation9 + $0xd4] sm:$0xf]
          %v554 = vld [vmem:[#allocation9 + $0xd8] sm:$0xf]
          %v555 = vld [vmem:[#allocation9 + $0xdc] sm:$0xf]
          %v556 = vld [vmem:[#allocation9 + $0xe0] sm:$0xf]
          %v557 = vld [vmem:[#allocation9 + $0xe4] sm:$0xf]
          %v558 = vld [vmem:[#allocation9 + $0xe8] sm:$0xf]
          %v559 = vld [vmem:[#allocation9 + $0xec] sm:$0xf]
          %v560 = vld [vmem:[#allocation9 + $0xf0] sm:$0xf]
          %v561 = vld [vmem:[#allocation9 + $0xf4] sm:$0xf]
          %v562 = vld [vmem:[#allocation9 + $0xf8] sm:$0xf]
          %v563 = vld [vmem:[#allocation9 + $0xfc] sm:$0xf]
          %v564 = vld [vmem:[#allocation9 + $0x100] sm:$0xf]
          %v565 = vld [vmem:[#allocation9 + $0x104] sm:$0xf]
          %v566 = vld [vmem:[#allocation9 + $0x108] sm:$0xf]
          %v567 = vld [vmem:[#allocation9 + $0x10c] sm:$0xf]
          %v568 = vld [vmem:[#allocation9 + $0x110] sm:$0xf]
          %v569 = vld [vmem:[#allocation9 + $0x114] sm:$0xf]
          %v570 = vld [vmem:[#allocation9 + $0x118] sm:$0xf]
          %v571 = vld [vmem:[#allocation9 + $0x11c] sm:$0xf]
          %v572 = vld [vmem:[#allocation9 + $0x120] sm:$0xf]
          %v573 = vld [vmem:[#allocation9 + $0x124] sm:$0xf]
          %v574 = vld [vmem:[#allocation9 + $0x128] sm:$0xf]
          %v575 = vld [vmem:[#allocation9 + $0x12c] sm:$0xf]
          %v576 = vld [vmem:[#allocation9 + $0x130] sm:$0xf]
          %v577 = vld [vmem:[#allocation9 + $0x134] sm:$0xf]
          %v578 = vld [vmem:[#allocation9 + $0x138] sm:$0xf]
          %v579 = vld [vmem:[#allocation9 + $0x13c] sm:$0xf]
          %v580 = vld [vmem:[#allocation9 + $0x140] sm:$0xf]
          %v581 = vld [vmem:[#allocation9 + $0x144] sm:$0xf]
          %v582 = vld [vmem:[#allocation9 + $0x148] sm:$0xf]
          %v583 = vld [vmem:[#allocation9 + $0x14c] sm:$0xf]
          %v584 = vld [vmem:[#allocation9 + $0x150] sm:$0xf]
          %v585 = vld [vmem:[#allocation9 + $0x154] sm:$0xf]
          %v586 = vld [vmem:[#allocation9 + $0x158] sm:$0xf]
          %v587 = vld [vmem:[#allocation9 + $0x15c] sm:$0xf]
          %v588 = vld [vmem:[#allocation9 + $0x160] sm:$0xf]
          %v589 = vld [vmem:[#allocation9 + $0x164] sm:$0xf]
          %v590 = vld [vmem:[#allocation9 + $0x168] sm:$0xf]
          %v591 = vld [vmem:[#allocation9 + $0x16c] sm:$0xf]
          %v592 = vld [vmem:[#allocation9 + $0x170] sm:$0xf]
          %v593 = vld [vmem:[#allocation9 + $0x174] sm:$0xf]
          %v594 = vld [vmem:[#allocation9 + $0x178] sm:$0xf]
          %v595 = vld [vmem:[#allocation9 + $0x17c] sm:$0xf]
          %v596 = vld [vmem:[#allocation9 + $0x180] sm:$0xf]
          %v597 = vld [vmem:[#allocation9 + $0x184] sm:$0xf]
          %v598 = vld [vmem:[#allocation9 + $0x188] sm:$0xf]
          %v599 = vld [vmem:[#allocation9 + $0x18c] sm:$0xf]
          %v600 = vld [vmem:[#allocation9 + $0x190] sm:$0xf]
          %v601 = vld [vmem:[#allocation9 + $0x194] sm:$0xf]
          %v602 = vld [vmem:[#allocation9 + $0x198] sm:$0xf]
          %v603 = vld [vmem:[#allocation9 + $0x19c] sm:$0xf]
          %v604 = vld [vmem:[#allocation9 + $0x1a0] sm:$0xf]
          %v605 = vld [vmem:[#allocation9 + $0x1a4] sm:$0xf]
          %v606 = vld [vmem:[#allocation9 + $0x1a8] sm:$0xf]
          %v607 = vld [vmem:[#allocation9 + $0x1ac] sm:$0xf]
          %v608 = vld [vmem:[#allocation9 + $0x1b0] sm:$0xf]
          %v609 = vld [vmem:[#allocation9 + $0x1b4] sm:$0xf]
          %v610 = vld [vmem:[#allocation9 + $0x1b8] sm:$0xf]
          %v611 = vld [vmem:[#allocation9 + $0x1bc] sm:$0xf]
          %v612 = vld [vmem:[#allocation9 + $0x1c0] sm:$0xf]
          %v613 = vld [vmem:[#allocation9 + $0x1c4] sm:$0xf]
          %v614 = vld [vmem:[#allocation9 + $0x1c8] sm:$0xf]
          %v615 = vld [vmem:[#allocation9 + $0x1cc] sm:$0xf]
          %v616 = vld [vmem:[#allocation9 + $0x1d0] sm:$0xf]
          %v617 = vld [vmem:[#allocation9 + $0x1d4] sm:$0xf]
          %v618 = vld [vmem:[#allocation9 + $0x1d8] sm:$0xf]
          %v619 = vld [vmem:[#allocation9 + $0x1dc] sm:$0xf]
          %v620 = vld [vmem:[#allocation9 + $0x1e0] sm:$0xf]
          %v621 = vld [vmem:[#allocation9 + $0x1e4] sm:$0xf]
          %v622 = vld [vmem:[#allocation9 + $0x1e8] sm:$0xf]
          %v623 = vld [vmem:[#allocation9 + $0x1ec] sm:$0xf]
          %v624 = vld [vmem:[#allocation9 + $0x1f0] sm:$0xf]
          %v625 = vld [vmem:[#allocation9 + $0x1f4] sm:$0xf]
          %v626 = vld [vmem:[#allocation9 + $0x1f8] sm:$0xf]
          %v627 = vld [vmem:[#allocation9 + $0x1fc] sm:$0xf]
          %v628 = vld [vmem:[%s5] sm:$0xff]
          %v757 = vunpack.c.l.b16 %v500
          %v758 = vunpack.c.l.b16 %v501
          %v759 = vunpack.c.l.b16 %v502
          %v760 = vunpack.c.l.b16 %v503
          %v761 = vunpack.c.l.b16 %v504
          %v762 = vunpack.c.l.b16 %v505
          %v763 = vunpack.c.l.b16 %v506
          %v764 = vunpack.c.l.b16 %v507
          %v765 = vunpack.c.l.b16 %v508
          %v766 = vunpack.c.l.b16 %v509
          %v767 = vunpack.c.l.b16 %v510
          %v768 = vunpack.c.l.b16 %v511
          %v769 = vunpack.c.l.b16 %v512
          %v770 = vunpack.c.l.b16 %v513
          %v771 = vunpack.c.l.b16 %v514
          %v772 = vunpack.c.l.b16 %v515
          %v773 = vunpack.c.l.b16 %v516
          %v774 = vunpack.c.l.b16 %v517
          %v775 = vunpack.c.l.b16 %v518
          %v776 = vunpack.c.l.b16 %v519
          %v777 = vunpack.c.l.b16 %v520
          %v778 = vunpack.c.l.b16 %v521
          %v779 = vunpack.c.l.b16 %v522
          %v780 = vunpack.c.l.b16 %v523
          %v781 = vunpack.c.l.b16 %v524
          %v782 = vunpack.c.l.b16 %v525
          %v783 = vunpack.c.l.b16 %v526
          %v784 = vunpack.c.l.b16 %v527
          %v785 = vunpack.c.l.b16 %v528
          %v786 = vunpack.c.l.b16 %v529
          %v787 = vunpack.c.l.b16 %v530
          %v788 = vunpack.c.l.b16 %v531
          %v789 = vunpack.c.l.b16 %v532
          %v790 = vunpack.c.l.b16 %v533
          %v791 = vunpack.c.l.b16 %v534
          %v792 = vunpack.c.l.b16 %v535
          %v793 = vunpack.c.l.b16 %v536
          %v794 = vunpack.c.l.b16 %v537
          %v795 = vunpack.c.l.b16 %v538
          %v796 = vunpack.c.l.b16 %v539
          %v797 = vunpack.c.l.b16 %v540
          %v798 = vunpack.c.l.b16 %v541
          %v799 = vunpack.c.l.b16 %v542
          %v800 = vunpack.c.l.b16 %v543
          %v801 = vunpack.c.l.b16 %v544
          %v802 = vunpack.c.l.b16 %v545
          %v803 = vunpack.c.l.b16 %v546
          %v804 = vunpack.c.l.b16 %v547
          %v805 = vunpack.c.l.b16 %v548
          %v806 = vunpack.c.l.b16 %v549
          %v807 = vunpack.c.l.b16 %v550
          %v808 = vunpack.c.l.b16 %v551
          %v809 = vunpack.c.l.b16 %v552
          %v810 = vunpack.c.l.b16 %v553
          %v811 = vunpack.c.l.b16 %v554
          %v812 = vunpack.c.l.b16 %v555
          %v813 = vunpack.c.l.b16 %v556
          %v814 = vunpack.c.l.b16 %v557
          %v815 = vunpack.c.l.b16 %v558
          %v816 = vunpack.c.l.b16 %v559
          %v817 = vunpack.c.l.b16 %v560
          %v818 = vunpack.c.l.b16 %v561
          %v819 = vunpack.c.l.b16 %v562
          %v820 = vunpack.c.l.b16 %v563
          %v821 = vunpack.c.l.b16 %v564
          %v822 = vunpack.c.l.b16 %v565
          %v823 = vunpack.c.l.b16 %v566
          %v824 = vunpack.c.l.b16 %v567
          %v825 = vunpack.c.l.b16 %v568
          %v826 = vunpack.c.l.b16 %v569
          %v827 = vunpack.c.l.b16 %v570
          %v828 = vunpack.c.l.b16 %v571
          %v829 = vunpack.c.l.b16 %v572
          %v830 = vunpack.c.l.b16 %v573
          %v831 = vunpack.c.l.b16 %v574
          %v832 = vunpack.c.l.b16 %v575
          %v833 = vunpack.c.l.b16 %v576
          %v834 = vunpack.c.l.b16 %v577
          %v835 = vunpack.c.l.b16 %v578
          %v836 = vunpack.c.l.b16 %v579
          %v837 = vunpack.c.l.b16 %v580
          %v838 = vunpack.c.l.b16 %v581
          %v839 = vunpack.c.l.b16 %v582
          %v840 = vunpack.c.l.b16 %v583
          %v841 = vunpack.c.l.b16 %v584
          %v842 = vunpack.c.l.b16 %v585
          %v843 = vunpack.c.l.b16 %v586
          %v844 = vunpack.c.l.b16 %v587
          %v845 = vunpack.c.l.b16 %v588
          %v846 = vunpack.c.l.b16 %v589
          %v847 = vunpack.c.l.b16 %v590
          %v848 = vunpack.c.l.b16 %v591
          %v849 = vunpack.c.l.b16 %v592
          %v850 = vunpack.c.l.b16 %v593
          %v851 = vunpack.c.l.b16 %v594
          %v852 = vunpack.c.l.b16 %v595
          %v853 = vunpack.c.l.b16 %v596
          %v854 = vunpack.c.l.b16 %v597
          %v855 = vunpack.c.l.b16 %v598
          %v856 = vunpack.c.l.b16 %v599
          %v857 = vunpack.c.l.b16 %v600
          %v858 = vunpack.c.l.b16 %v601
          %v859 = vunpack.c.l.b16 %v602
          %v860 = vunpack.c.l.b16 %v603
          %v861 = vunpack.c.l.b16 %v604
          %v862 = vunpack.c.l.b16 %v605
          %v863 = vunpack.c.l.b16 %v606
          %v864 = vunpack.c.l.b16 %v607
          %v865 = vunpack.c.l.b16 %v608
          %v866 = vunpack.c.l.b16 %v609
          %v867 = vunpack.c.l.b16 %v610
          %v868 = vunpack.c.l.b16 %v611
          %v869 = vunpack.c.l.b16 %v612
          %v870 = vunpack.c.l.b16 %v613
          %v871 = vunpack.c.l.b16 %v614
          %v872 = vunpack.c.l.b16 %v615
          %v873 = vunpack.c.l.b16 %v616
          %v874 = vunpack.c.l.b16 %v617
          %v875 = vunpack.c.l.b16 %v618
          %v876 = vunpack.c.l.b16 %v619
          %v877 = vunpack.c.l.b16 %v620
          %v878 = vunpack.c.l.b16 %v621
          %v879 = vunpack.c.l.b16 %v622
          %v880 = vunpack.c.l.b16 %v623
          %v881 = vunpack.c.l.b16 %v624
          %v882 = vunpack.c.l.b16 %v625
          %v883 = vunpack.c.l.b16 %v626
          %v884 = vunpack.c.l.b16 %v627
          %v885 = vpack.c.b16 %v758, %v757
          %v886 = vpack.c.b16 %v760, %v759
          %v887 = vpack.c.b16 %v762, %v761
          %v888 = vpack.c.b16 %v764, %v763
          %v889 = vpack.c.b16 %v766, %v765
          %v890 = vpack.c.b16 %v768, %v767
          %v891 = vpack.c.b16 %v770, %v769
          %v892 = vpack.c.b16 %v772, %v771
          %v893 = vpack.c.b16 %v774, %v773
          %v894 = vpack.c.b16 %v776, %v775
          %v895 = vpack.c.b16 %v778, %v777
          %v896 = vpack.c.b16 %v780, %v779
          %v897 = vpack.c.b16 %v782, %v781
          %v898 = vpack.c.b16 %v784, %v783
          %v899 = vpack.c.b16 %v786, %v785
          %v900 = vpack.c.b16 %v788, %v787
          %v901 = vpack.c.b16 %v790, %v789
          %v902 = vpack.c.b16 %v792, %v791
          %v903 = vpack.c.b16 %v794, %v793
          %v904 = vpack.c.b16 %v796, %v795
          %v905 = vpack.c.b16 %v798, %v797
          %v906 = vpack.c.b16 %v800, %v799
          %v907 = vpack.c.b16 %v802, %v801
          %v908 = vpack.c.b16 %v804, %v803
          %v909 = vpack.c.b16 %v806, %v805
          %v910 = vpack.c.b16 %v808, %v807
          %v911 = vpack.c.b16 %v810, %v809
          %v912 = vpack.c.b16 %v812, %v811
          %v913 = vpack.c.b16 %v814, %v813
          %v914 = vpack.c.b16 %v816, %v815
          %v915 = vpack.c.b16 %v818, %v817
          %v916 = vpack.c.b16 %v820, %v819
          %v917 = vpack.c.b16 %v822, %v821
          %v918 = vpack.c.b16 %v824, %v823
          %v919 = vpack.c.b16 %v826, %v825
          %v920 = vpack.c.b16 %v828, %v827
          %v921 = vpack.c.b16 %v830, %v829
          %v922 = vpack.c.b16 %v832, %v831
          %v923 = vpack.c.b16 %v834, %v833
          %v924 = vpack.c.b16 %v836, %v835
          %v925 = vpack.c.b16 %v838, %v837
          %v926 = vpack.c.b16 %v840, %v839
          %v927 = vpack.c.b16 %v842, %v841
          %v928 = vpack.c.b16 %v844, %v843
          %v929 = vpack.c.b16 %v846, %v845
          %v930 = vpack.c.b16 %v848, %v847
          %v931 = vpack.c.b16 %v850, %v849
          %v932 = vpack.c.b16 %v852, %v851
          %v933 = vpack.c.b16 %v854, %v853
          %v934 = vpack.c.b16 %v856, %v855
          %v935 = vpack.c.b16 %v858, %v857
          %v936 = vpack.c.b16 %v860, %v859
          %v937 = vpack.c.b16 %v862, %v861
          %v938 = vpack.c.b16 %v864, %v863
          %v939 = vpack.c.b16 %v866, %v865
          %v940 = vpack.c.b16 %v868, %v867
          %v941 = vpack.c.b16 %v870, %v869
          %v942 = vpack.c.b16 %v872, %v871
          %v943 = vpack.c.b16 %v874, %v873
          %v944 = vpack.c.b16 %v876, %v875
          %v945 = vpack.c.b16 %v878, %v877
          %v946 = vpack.c.b16 %v880, %v879
          %v947 = vpack.c.b16 %v882, %v881
          %v948 = vpack.c.b16 %v884, %v883
          %1013 = vmatprep.subr.bf16.mxu0 0
          %1014 = vmatpush1.bf16.msra.mxu0 %v892
          %1015 = vmatprep.subr.bf16.mxu0 0
          %1016 = vmatpush1.bf16.msra.mxu0 %v891
          %1017 = vmatprep.subr.bf16.mxu0 0
          %1018 = vmatpush1.bf16.msra.mxu0 %v890
          %1019 = vmatprep.subr.bf16.mxu0 0
          %1020 = vmatpush1.bf16.msra.mxu0 %v889
          %1021 = vmatprep.subr.bf16.mxu0 0
          %1022 = vmatpush1.bf16.msra.mxu0 %v888
          %1023 = vmatprep.subr.bf16.mxu0 0
          %1024 = vmatpush1.bf16.msra.mxu0 %v887
          %1025 = vmatprep.subr.bf16.mxu0 0
          %1026 = vmatpush1.bf16.msra.mxu0 %v886
          %1027 = vmatprep.subr.bf16.mxu0 0
          %1028 = vmatpush1.bf16.msra.mxu0 %v885
          %1029 = vmatprep.subr.bf16.mxu0 0
          %1030 = vmatpush2.bf16.msra.mxu0 %v900
          %1031 = vmatprep.subr.bf16.mxu0 0
          %1032 = vmatpush2.bf16.msra.mxu0 %v899
          %1033 = vmatprep.subr.bf16.mxu0 0
          %1034 = vmatpush2.bf16.msra.mxu0 %v898
          %1035 = vmatprep.subr.bf16.mxu0 0
          %1036 = vmatpush2.bf16.msra.mxu0 %v897
          %1037 = vmatprep.subr.bf16.mxu0 0
          %1038 = vmatpush2.bf16.msra.mxu0 %v896
          %1039 = vmatprep.subr.bf16.mxu0 0
          %1040 = vmatpush2.bf16.msra.mxu0 %v895
          %1041 = vmatprep.subr.bf16.mxu0 0
          %1042 = vmatpush2.bf16.msra.mxu0 %v894
          %1043 = vmatprep.subr.bf16.mxu0 0
          %1044 = vmatpush2.bf16.msra.mxu0 %v893
          %1045 = vmatprep.mubr.bf16.mxu0 %v493
          %1046 = vmatmul.mubr.bf16.gmra.mxu0 %v492
          %v1047 = vpop.f32.mrf.mxu0
          %v1048 = vadd.f32 %v628, %v1047
          %v1049 = vpop.f32.mrf.mxu0
          %v1050 = vpop.f32.mrf.mxu0
          %v1051 = vpop.f32.mrf.mxu0
          %1052 = vdwg.mxu0
          %1053 = vmatprep.subr.bf16.mxu0 0
          %1054 = vmatpush1.bf16.msra.mxu0 %v908
          %1055 = vmatprep.subr.bf16.mxu0 0
          %1056 = vmatpush1.bf16.msra.mxu0 %v907
          %1057 = vmatprep.subr.bf16.mxu0 0
          %1058 = vmatpush1.bf16.msra.mxu0 %v906
          %1059 = vmatprep.subr.bf16.mxu0 0
          %1060 = vmatpush1.bf16.msra.mxu0 %v905
          %1061 = vmatprep.subr.bf16.mxu0 0
          %1062 = vmatpush1.bf16.msra.mxu0 %v904
          %1063 = vmatprep.subr.bf16.mxu0 0
          %1064 = vmatpush1.bf16.msra.mxu0 %v903
          %1065 = vmatprep.subr.bf16.mxu0 0
          %1066 = vmatpush1.bf16.msra.mxu0 %v902
          %1067 = vmatprep.subr.bf16.mxu0 0
          %1068 = vmatpush1.bf16.msra.mxu0 %v901
          %1069 = vmatprep.subr.bf16.mxu0 0
          %1070 = vmatpush2.bf16.msra.mxu0 %v916
          %1071 = vmatprep.subr.bf16.mxu0 0
          %1072 = vmatpush2.bf16.msra.mxu0 %v915
          %1073 = vmatprep.subr.bf16.mxu0 0
          %1074 = vmatpush2.bf16.msra.mxu0 %v914
          %1075 = vmatprep.subr.bf16.mxu0 0
          %1076 = vmatpush2.bf16.msra.mxu0 %v913
          %1077 = vmatprep.subr.bf16.mxu0 0
          %1078 = vmatpush2.bf16.msra.mxu0 %v912
          %1079 = vmatprep.subr.bf16.mxu0 0
          %1080 = vmatpush2.bf16.msra.mxu0 %v911
          %1081 = vmatprep.subr.bf16.mxu0 0
          %1082 = vmatpush2.bf16.msra.mxu0 %v910
          %1083 = vmatprep.subr.bf16.mxu0 0
          %1084 = vmatpush2.bf16.msra.mxu0 %v909
          %1085 = vmatprep.mubr.bf16.mxu0 %v495
          %1086 = vmatmul.mubr.bf16.gmra.mxu0 %v494
          %v1087 = vpop.f32.mrf.mxu0
          %v1088 = vadd.f32 %v1048, %v1087
          %v1089 = vpop.f32.mrf.mxu0
          %v1090 = vpop.f32.mrf.mxu0
          %v1091 = vpop.f32.mrf.mxu0
          %1092 = vdwg.mxu0
          %1093 = vmatprep.subr.bf16.mxu0 0
          %1094 = vmatpush1.bf16.msra.mxu0 %v924
          %1095 = vmatprep.subr.bf16.mxu0 0
          %1096 = vmatpush1.bf16.msra.mxu0 %v923
          %1097 = vmatprep.subr.bf16.mxu0 0
          %1098 = vmatpush1.bf16.msra.mxu0 %v922
          %1099 = vmatprep.subr.bf16.mxu0 0
          %1100 = vmatpush1.bf16.msra.mxu0 %v921
          %1101 = vmatprep.subr.bf16.mxu0 0
          %1102 = vmatpush1.bf16.msra.mxu0 %v920
          %1103 = vmatprep.subr.bf16.mxu0 0
          %1104 = vmatpush1.bf16.msra.mxu0 %v919
          %1105 = vmatprep.subr.bf16.mxu0 0
          %1106 = vmatpush1.bf16.msra.mxu0 %v918
          %1107 = vmatprep.subr.bf16.mxu0 0
          %1108 = vmatpush1.bf16.msra.mxu0 %v917
          %1109 = vmatprep.subr.bf16.mxu0 0
          %1110 = vmatpush2.bf16.msra.mxu0 %v932
          %1111 = vmatprep.subr.bf16.mxu0 0
          %1112 = vmatpush2.bf16.msra.mxu0 %v931
          %1113 = vmatprep.subr.bf16.mxu0 0
          %1114 = vmatpush2.bf16.msra.mxu0 %v930
          %1115 = vmatprep.subr.bf16.mxu0 0
          %1116 = vmatpush2.bf16.msra.mxu0 %v929
          %1117 = vmatprep.subr.bf16.mxu0 0
          %1118 = vmatpush2.bf16.msra.mxu0 %v928
          %1119 = vmatprep.subr.bf16.mxu0 0
          %1120 = vmatpush2.bf16.msra.mxu0 %v927
          %1121 = vmatprep.subr.bf16.mxu0 0
          %1122 = vmatpush2.bf16.msra.mxu0 %v926
          %1123 = vmatprep.subr.bf16.mxu0 0
          %1124 = vmatpush2.bf16.msra.mxu0 %v925
          %1125 = vmatprep.mubr.bf16.mxu0 %v497
          %1126 = vmatmul.mubr.bf16.gmra.mxu0 %v496
          %v1127 = vpop.f32.mrf.mxu0
          %v1128 = vadd.f32 %v1088, %v1127
          %v1129 = vpop.f32.mrf.mxu0
          %v1130 = vpop.f32.mrf.mxu0
          %v1131 = vpop.f32.mrf.mxu0
          %1132 = vdwg.mxu0
          %1133 = vmatprep.subr.bf16.mxu0 0
          %1134 = vmatpush1.bf16.msra.mxu0 %v940
          %1135 = vmatprep.subr.bf16.mxu0 0
          %1136 = vmatpush1.bf16.msra.mxu0 %v939
          %1137 = vmatprep.subr.bf16.mxu0 0
          %1138 = vmatpush1.bf16.msra.mxu0 %v938
          %1139 = vmatprep.subr.bf16.mxu0 0
          %1140 = vmatpush1.bf16.msra.mxu0 %v937
          %1141 = vmatprep.subr.bf16.mxu0 0
          %1142 = vmatpush1.bf16.msra.mxu0 %v936
          %1143 = vmatprep.subr.bf16.mxu0 0
          %1144 = vmatpush1.bf16.msra.mxu0 %v935
          %1145 = vmatprep.subr.bf16.mxu0 0
          %1146 = vmatpush1.bf16.msra.mxu0 %v934
          %1147 = vmatprep.subr.bf16.mxu0 0
          %1148 = vmatpush1.bf16.msra.mxu0 %v933
          %1149 = vmatprep.subr.bf16.mxu0 0
          %1150 = vmatpush2.bf16.msra.mxu0 %v948
          %1151 = vmatprep.subr.bf16.mxu0 0
          %1152 = vmatpush2.bf16.msra.mxu0 %v947
          %1153 = vmatprep.subr.bf16.mxu0 0
          %1154 = vmatpush2.bf16.msra.mxu0 %v946
          %1155 = vmatprep.subr.bf16.mxu0 0
          %1156 = vmatpush2.bf16.msra.mxu0 %v945
          %1157 = vmatprep.subr.bf16.mxu0 0
          %1158 = vmatpush2.bf16.msra.mxu0 %v944
          %1159 = vmatprep.subr.bf16.mxu0 0
          %1160 = vmatpush2.bf16.msra.mxu0 %v943
          %1161 = vmatprep.subr.bf16.mxu0 0
          %1162 = vmatpush2.bf16.msra.mxu0 %v942
          %1163 = vmatprep.subr.bf16.mxu0 0
          %1164 = vmatpush2.bf16.msra.mxu0 %v941
          %1165 = vmatprep.mubr.bf16.mxu0 %v499
          %1166 = vmatmul.mubr.bf16.gmra.mxu0 %v498
          %v1167 = vpop.f32.mrf.mxu0
          %v1168 = vadd.f32 %v1128, %v1167
          %v1169 = vpop.f32.mrf.mxu0
          %v1170 = vpop.f32.mrf.mxu0
          %v1171 = vpop.f32.mrf.mxu0
          %1172 = vdwg.mxu0
          %v1173 = vmax.f32 %v1168, 0.0
          %1174 = vst [vmem:[#allocation2] sm:$0xff] %v1173
          %vm1175 = vcmask 0
          %1176 = vst.msk [vmem:[#allocation3] sm:$0x1] %vm1175, 0.0
        $region80: #{tpu_custom_call.1} parent=55 // pred_fallthru
          _
        %v1177 = vld [vmem:[#allocation2] sm:$0xff]
        %v1178 = vpack.c.bf16 %v1177, %v1177
        %v1179 = vld [vmem:[%s389] sm:$0xff]
        %v1180 = vld [vmem:[%s389 + $0x8] sm:$0xff]
        %v1181 = vld [vmem:[%s389 + $0x10] sm:$0xff]
        %v1182 = vld [vmem:[%s389 + $0x18] sm:$0xff]
        %v1183 = vld [vmem:[%s389 + $0x20] sm:$0xff]
        %v1184 = vld [vmem:[%s389 + $0x28] sm:$0xff]
        %v1185 = vld [vmem:[%s389 + $0x30] sm:$0xff]
        %v1186 = vld [vmem:[%s389 + $0x38] sm:$0xff]
        %v1187 = vld [vmem:[%s389 + $0x40] sm:$0xff]
        %v1188 = vld [vmem:[%s389 + $0x48] sm:$0xff]
        %v1189 = vld [vmem:[%s389 + $0x50] sm:$0xff]
        %v1190 = vld [vmem:[%s389 + $0x58] sm:$0xff]
        %v1191 = vld [vmem:[%s389 + $0x60] sm:$0xff]
        %v1192 = vld [vmem:[%s389 + $0x68] sm:$0xff]
        %v1193 = vld [vmem:[%s389 + $0x70] sm:$0xff]
        %v1194 = vld [vmem:[%s389 + $0x78] sm:$0xff]
        %v1195 = vld [vmem:[%s433] sm:$0x3]
        %v1197 = vlaneseq
        %v1198 = vshrl.u32 %v1197, 7
        %v1199 = vsub.s32 0, %v1198
        %v1200 = vrot.slane %v1195, %v1199
        %v1201 = vlaneseq
        %v1202 = vshrl.u32 %v1201, 7
        %v1203 = vsub.s32 1, %v1202
        %v1204 = vrot.slane %v1195, %v1203
        %v1223 = vunpack.c.l.b16 %v1179
        %v1224 = vunpack.c.h.b16 %v1179
        %v1225 = vunpack.c.l.b16 %v1180
        %v1226 = vunpack.c.h.b16 %v1180
        %v1227 = vunpack.c.l.b16 %v1181
        %v1228 = vunpack.c.h.b16 %v1181
        %v1229 = vunpack.c.l.b16 %v1182
        %v1230 = vunpack.c.h.b16 %v1182
        %v1231 = vunpack.c.l.b16 %v1183
        %v1232 = vunpack.c.h.b16 %v1183
        %v1233 = vunpack.c.l.b16 %v1184
        %v1234 = vunpack.c.h.b16 %v1184
        %v1235 = vunpack.c.l.b16 %v1185
        %v1236 = vunpack.c.h.b16 %v1185
        %v1237 = vunpack.c.l.b16 %v1186
        %v1238 = vunpack.c.h.b16 %v1186
        %v1239 = vunpack.c.l.b16 %v1187
        %v1240 = vunpack.c.h.b16 %v1187
        %v1241 = vunpack.c.l.b16 %v1188
        %v1242 = vunpack.c.h.b16 %v1188
        %v1243 = vunpack.c.l.b16 %v1189
        %v1244 = vunpack.c.h.b16 %v1189
        %v1245 = vunpack.c.l.b16 %v1190
        %v1246 = vunpack.c.h.b16 %v1190
        %v1247 = vunpack.c.l.b16 %v1191
        %v1248 = vunpack.c.h.b16 %v1191
        %v1249 = vunpack.c.l.b16 %v1192
        %v1250 = vunpack.c.h.b16 %v1192
        %v1251 = vunpack.c.l.b16 %v1193
        %v1252 = vunpack.c.h.b16 %v1193
        %v1253 = vunpack.c.l.b16 %v1194
        %v1254 = vunpack.c.h.b16 %v1194
        %v1255 = vpack.c.b16 %v1225, %v1223
        %v1256 = vpack.c.b16 %v1226, %v1224
        %v1257 = vpack.c.b16 %v1229, %v1227
        %v1258 = vpack.c.b16 %v1230, %v1228
        %v1259 = vpack.c.b16 %v1233, %v1231
        %v1260 = vpack.c.b16 %v1234, %v1232
        %v1261 = vpack.c.b16 %v1237, %v1235
        %v1262 = vpack.c.b16 %v1238, %v1236
        %v1263 = vpack.c.b16 %v1241, %v1239
        %v1264 = vpack.c.b16 %v1242, %v1240
        %v1265 = vpack.c.b16 %v1245, %v1243
        %v1266 = vpack.c.b16 %v1246, %v1244
        %v1267 = vpack.c.b16 %v1249, %v1247
        %v1268 = vpack.c.b16 %v1250, %v1248
        %v1269 = vpack.c.b16 %v1253, %v1251
        %v1270 = vpack.c.b16 %v1254, %v1252
        %1287 = vmatprep.subr.bf16.mxu0 %v1270
        %1288 = vmatpush1.bf16.msra.mxu0 %v1269
        %1289 = vmatprep.subr.bf16.mxu0 %v1268
        %1290 = vmatpush1.bf16.msra.mxu0 %v1267
        %1291 = vmatprep.subr.bf16.mxu0 %v1266
        %1292 = vmatpush1.bf16.msra.mxu0 %v1265
        %1293 = vmatprep.subr.bf16.mxu0 %v1264
        %1294 = vmatpush1.bf16.msra.mxu0 %v1263
        %1295 = vmatprep.subr.bf16.mxu0 %v1262
        %1296 = vmatpush1.bf16.msra.mxu0 %v1261
        %1297 = vmatprep.subr.bf16.mxu0 %v1260
        %1298 = vmatpush1.bf16.msra.mxu0 %v1259
        %1299 = vmatprep.subr.bf16.mxu0 %v1258
        %1300 = vmatpush1.bf16.msra.mxu0 %v1257
        %1301 = vmatprep.subr.bf16.mxu0 %v1256
        %1302 = vmatpush1.bf16.msra.mxu0 %v1255
        %1303 = vmatprep.subr.bf16.mxu0 0
        %1304 = vmatpush2.bf16.msra.mxu0 0
        %1305 = vmatprep.subr.bf16.mxu0 0
        %1306 = vmatpush2.bf16.msra.mxu0 0
        %1307 = vmatprep.subr.bf16.mxu0 0
        %1308 = vmatpush2.bf16.msra.mxu0 0
        %1309 = vmatprep.subr.bf16.mxu0 0
        %1310 = vmatpush2.bf16.msra.mxu0 0
        %1311 = vmatprep.subr.bf16.mxu0 0
        %1312 = vmatpush2.bf16.msra.mxu0 0
        %1313 = vmatprep.subr.bf16.mxu0 0
        %1314 = vmatpush2.bf16.msra.mxu0 0
        %1315 = vmatprep.subr.bf16.mxu0 0
        %1316 = vmatpush2.bf16.msra.mxu0 0
        %1317 = vmatprep.subr.bf16.mxu0 0
        %1318 = vmatpush2.bf16.msra.mxu0 0
        %1319 = vmatprep.mubr.bf16.mxu0 0
        %1320 = vmatmul.mubr.bf16.gmra.mxu0 %v1178
        %v1321 = vpop.f32.mrf.mxu0
        %v1322 = vadd.f32 %v1200, %v1321
        %v1323 = vpop.f32.mrf.mxu0
        %v1324 = vadd.f32 %v1204, %v1323
        %v1325 = vpop.f32.mrf.mxu0
        %v1326 = vpop.f32.mrf.mxu0
        %1327 = vdwg.mxu0
        %v1328 = vld [vmem:[%s380] sm:$0xff]
        %v1329 = vld [vmem:[%s380 + $0x8] sm:$0xff]
        %v1330 = vsub.f32 %v1322, %v1328
        %v1331 = vsub.f32 %v1324, %v1329
        %v1332 = vand.u32 2147483647, %v1330
        %v1333 = vand.u32 2147483647, %v1331
        %v1334 = vlaneseq
        %v1335 = vshrl.u32 %v1334, 7
        %vm1336 = vcmp.lt.s32.totalorder %v1335, 2
        %v1337 = vsel %vm1336, %v1332, 0.0
        %v1338 = vsel %vm1336, %v1333, 0.0
        %v1339 = vld [vmem:[#allocation3] sm:$0x1]
        %v1340 = vadd.f32 %v1337, %v1338
        %1341 = vadd.xlane.f32.xlu0 %v1340
        %v1342 = vpop.xlane.xlu0 %1341
        %v1343 = vrot.slane %v1342, 4
        %v1344 = vadd.f32 %v1342, %v1343
        %v1345 = vrot.slane %v1344, 2
        %v1346 = vadd.f32 %v1344, %v1345
        %v1347 = vrot.slane %v1346, 1
        %v1348 = vadd.f32 %v1346, %v1347
        %s1349 = vtos %v1348
        %v1350 = vstv %s1349
        %v1351 = vadd.f32 %v1339, %v1350
        %vm1352 = vcmask 0
        %1353 = vst.msk [vmem:[#allocation3] sm:$0x1] %vm1352, %v1351
        %v1354 = vld [vmem:[#allocation3] sm:$0x1]
        %v1355 = vmul.f32 %v1354, 0.00048828125
        %1356 = vst.msk [vmem:[#allocation13] sm:$0x1] %vm1352, %v1355
        // Predicated region
        $region81: #{tpu_custom_call.1} parent=55 // pred_check
          %p1357 = pneg %p243
        $region82: #{tpu_custom_call.1} parent=55 // pred_check_branch
          %1359 = sbr.rel (%p1357) target = $region84
        $region83: #{tpu_custom_call.1} parent=55 // pred_region
          %s1361 = ssub.s32 16, 16
          %1362 = vsyncadd [#allocation6], %s1361
          %s1364 = sshll.u32 [#allocation13], 4
          %s1365 = int_to_ptr.vmem [resolvable:$true] %s1364
          %1367 = dma.vmem_to_hbm [thread:$0]  %s1365, 16, %s9, [#allocation6]
        $region84: #{tpu_custom_call.1} parent=55 // pred_fallthru
          _
        // Predicated region
        $region85: #{tpu_custom_call.1} parent=55 // pred_check
          %p1368 = pneg %p243
        $region86: #{tpu_custom_call.1} parent=55 // pred_check_branch
          %1370 = sbr.rel (%p1368) target = $region88
        $region87: #{tpu_custom_call.1} parent=55 // pred_region
          %1371 = dma.done [#allocation6], 16
        $region88: #{tpu_custom_call.1} parent=55 // pred_fallthru
          _
      $region56: #{tpu_custom_call.1} parent=5 // pred_fallthru
        _
      %p1372 = scmp.le.s32.totalorder 2, %s21
      // Predicated region
      $region89: #{tpu_custom_call.1} parent=5 // pred_check
        %p1373 = pneg %p1372
      $region90: #{tpu_custom_call.1} parent=5 // pred_check_branch
        %1375 = sbr.rel (%p1373) target = $region92
      $region91: #{tpu_custom_call.1} parent=5 // pred_region
        %s1376 = ssub.s32 %s21, 2
      $region92: #{tpu_custom_call.1} parent=5 // pred_fallthru
        _
    $region6: #{tpu_custom_call.1} parent=1 // loop_footer
      %s25 = sadd.s32 1, %s21
    $region7: #{tpu_custom_call.1} parent=1 // loop_footer_branch
      %20 = sbr.rel target = $region3
    $region8: #{tpu_custom_call.1} parent=1 // loop_exit
      _
    %1377 = vsyncpa [#allocation5], 1
    %s1378 = scalar_lea.sflag [#allocation5], 1
    %1379 = vsyncpa %s1378, 1
    %1380 = vsyncpa [#allocation8], 1
    %1381 = vsyncpa [#allocation11], 1
    %s1382 = scalar_lea.sflag [#allocation11], 1
    %1383 = vsyncpa %s1382, 1
    %1384 = vsyncpa [#allocation6], 1
    %s1385 = scalar_lea.sflag [#allocation6], 1
    %1386 = vsyncpa %s1385, 1

</llo_original>
